<compile_context>
chip_gen: v7x
topology: tpu7x:2x2x1
jax: 0.10.0
libtpu: 0.0.40
codegen_flags: <defaults>
</compile_context>

<pallas_src>
import jax
import jax.numpy as jnp
from jax.experimental import pallas as pl
from jax.experimental.pallas import tpu as pltpu

_LANE = 128
_SUBL = 8
_N_SHARDS = 2   # leading "parallel" axis: ~2x on v7x (2 TCs), ~free elsewhere


def _make_kernel(n_valid_rows: int, n_elems: int, block_rows: int,
                 blocks_per_shard: int):
    inv_n = 1.0 / float(n_elems)

    def kernel(x_ref, o_ref, acc_ref):
        c = pl.program_id(0)     # shard (TensorCore on v7x)
        j = pl.program_id(1)     # row-block within the shard (reduction axis)

        @pl.when(j == 0)
        def _():
            acc_ref[...] = jnp.zeros_like(acc_ref)

        # Logical (unclamped) first row of this block.  Rows >= n_valid_rows
        # are OOB garbage from a partial block or a clamped duplicate -> mask.
        row0 = (c * blocks_per_shard + j) * block_rows
        local_row = jax.lax.broadcasted_iota(
            jnp.int32, (block_rows, _LANE), 0)
        valid = (row0 + local_row) < n_valid_rows

        x = x_ref[...].astype(jnp.float32)     # in-kernel cast (free vs DMA)
        hinge = jnp.maximum(1.0 - x, 0.0)
        acc_ref[...] += jnp.where(valid, hinge, 0.0)   # elementwise VPU accum

        @pl.when(j == pl.num_programs(1) - 1)
        def _():
            # Single cross-lane/sublane reduce + scale, once per shard.
            o_ref[0, 0] = jnp.sum(acc_ref[...]) * jnp.float32(inv_n)

    return kernel


def loss_g_realfake(lab: jax.Array, *, block_rows: int = 2048) -> jax.Array:
    """Pallas equivalent of LossGrealfake.forward(lab): mean(relu(1 - lab))."""
    n = lab.size
    flat = jnp.ravel(lab)                      # free reshape; keep native dtype

    # Pad with 1.0 (relu(1 - 1) == 0 contributes nothing) ONLY if the flat
    # length is not lane-aligned / too small; lane-aligned inputs take the
    # zero-copy path.
    min_len = _SUBL * _LANE
    padded_len = max(pl.cdiv(n, _LANE) * _LANE, min_len)
    if padded_len != n:
        pad = jnp.full((padded_len - n,), 1.0, dtype=flat.dtype)
        flat = jnp.concatenate([flat, pad])

    rows = padded_len // _LANE
    x2d = flat.reshape(rows, _LANE)            # lane-dense slab (free reshape)

    # Row tile: multiple of 8, capped at the array size.  At the default 2048
    # rows the double-buffered f32 input (2 MiB) + f32 accumulator (1 MiB)
    # stay ~3 MiB of VMEM — fine on v5e/v6e (32 MiB scoped) and v7x (64 MiB).
    tr = min(block_rows, (rows // _SUBL) * _SUBL)
    n_blocks = pl.cdiv(rows, tr)
    n_shards = min(_N_SHARDS, n_blocks)
    blocks_per_shard = pl.cdiv(n_blocks, n_shards)

    def in_map(c, j):
        blk = c * blocks_per_shard + j
        # Clamp so the DMA always stays in-bounds; the kernel masks duplicated
        # / out-of-range rows to zero using the unclamped logical index.
        return (jnp.minimum(blk, n_blocks - 1), 0)

    partials = pl.pallas_call(
        _make_kernel(rows, n, tr, blocks_per_shard),
        out_shape=jax.ShapeDtypeStruct((n_shards, 1), jnp.float32),
        grid_spec=pltpu.PrefetchScalarGridSpec(
            num_scalar_prefetch=0,
            grid=(n_shards, blocks_per_shard),
            in_specs=[pl.BlockSpec((tr, _LANE), in_map)],
            out_specs=pl.BlockSpec((1, 1), lambda c, j: (c, 0),
                                   memory_space=pltpu.SMEM),
            scratch_shapes=[pltpu.VMEM((tr, _LANE), jnp.float32)],
        ),
        compiler_params=pltpu.CompilerParams(
            dimension_semantics=("parallel", "arbitrary")),
    )(x2d)

    # Per-shard partials are already scaled by 1/n; sum them for the mean.
    return jnp.sum(partials)


if __name__ == "__main__":
    key = jax.random.PRNGKey(0)

    # `lab` plays the role of a discriminator output map, e.g. NCHW.
    lab = jax.random.normal(key, (2, 4, 16, 16), dtype=jnp.float32)
    loss = loss_g_realfake(lab)
    jax.block_until_ready(loss)
    ref = jnp.mean(jnp.maximum(1.0 - lab, 0.0))
    assert jnp.allclose(loss, ref, rtol=1e-6, atol=1e-6), (loss, ref)

    # Uneven shape + tiny block: exercises the tail-masking / 2-shard path.
    lab2 = jax.random.normal(jax.random.PRNGKey(1), (1, 3, 40, 40),
                             dtype=jnp.float32)
    loss2 = loss_g_realfake(lab2, block_rows=16)
    jax.block_until_ready(loss2)
    ref2 = jnp.mean(jnp.maximum(1.0 - lab2, 0.0))
    assert jnp.allclose(loss2, ref2, rtol=1e-6, atol=1e-6), (loss2, ref2)

    print("KERNEL_OK")
</pallas_src>

<mosaic_0001>
module attributes {stable_mosaic.version = 11 : i64} {
  func.func @kernel(%arg0: i32, %arg1: i32, %arg2: memref<16x128xf32, #tpu.memory_space<vmem>>, %arg3: memref<1x1xf32, #tpu.memory_space<smem>>, %arg4: memref<16x128xf32, #tpu.memory_space<vmem>>) attributes {dimension_semantics = [#tpu.dimension_semantics<parallel>, #tpu.dimension_semantics<arbitrary>], iteration_bounds = array<i64: 1, 1>, scalar_prefetch = 0 : i64, scratch_operands = 1 : i64, tpu.core_type = #tpu.core_type<tc>, window_params = [{transform_indices = @transform_0, window_bounds = array<i64: 16, 128>}, {transform_indices = @transform_1, window_bounds = array<i64: 1, 1>}]} {
    %c0_i32 = arith.constant 0 : i32
    %0 = arith.cmpi eq, %arg1, %c0_i32 : i32
    %1 = arith.extui %0 : i1 to i32
    %c0_i32_0 = arith.constant 0 : i32
    %2 = arith.cmpi ne, %1, %c0_i32_0 : i32
    scf.if %2 {
      %cst_11 = arith.constant 0.000000e+00 : f32
      %24 = vector.broadcast %cst_11 : f32 to vector<16x128xf32>
      %c0_12 = arith.constant 0 : index
      %c0_13 = arith.constant 0 : index
      %25 = vector.load %arg4[%c0_12, %c0_13] : memref<16x128xf32, #tpu.memory_space<vmem>>, vector<16x128xf32>
      tpu.vector_store %arg4[%c0_12, %c0_13], %24 {strides = array<i32>} : memref<16x128xf32, #tpu.memory_space<vmem>>, vector<16x128xf32>,
    } else {
    }
    %c1_i32 = arith.constant 1 : i32
    %3 = arith.muli %arg0, %c1_i32 : i32
    %4 = arith.addi %3, %arg1 : i32
    %c16_i32 = arith.constant 16 : i32
    %5 = arith.muli %4, %c16_i32 : i32
    %6 = tpu.iota {dimensions = array<i32: 0>} : vector<16x128xi32>
    %7 = vector.broadcast %5 : i32 to vector<16x128xi32>
    %8 = arith.addi %7, %6 : vector<16x128xi32>
    %c16_i32_1 = arith.constant 16 : i32
    %9 = vector.broadcast %c16_i32_1 : i32 to vector<16x128xi32>
    %10 = arith.cmpi slt, %8, %9 : vector<16x128xi32>
    %c0 = arith.constant 0 : index
    %c0_2 = arith.constant 0 : index
    %11 = vector.load %arg2[%c0, %c0_2] : memref<16x128xf32, #tpu.memory_space<vmem>>, vector<16x128xf32>
    %cst = arith.constant 1.000000e+00 : f32
    %12 = vector.broadcast %cst : f32 to vector<16x128xf32>
    %13 = arith.subf %12, %11 : vector<16x128xf32>
    %cst_3 = arith.constant 0.000000e+00 : f32
    %14 = vector.broadcast %cst_3 : f32 to vector<16x128xf32>
    %15 = arith.maximumf %13, %14 : vector<16x128xf32>
    %c0_4 = arith.constant 0 : index
    %c0_5 = arith.constant 0 : index
    %16 = vector.load %arg4[%c0_4, %c0_5] : memref<16x128xf32, #tpu.memory_space<vmem>>, vector<16x128xf32>
    %cst_6 = arith.constant 0.000000e+00 : f32
    %17 = vector.broadcast %cst_6 : f32 to vector<16x128xf32>
    %18 = arith.select %10, %15, %17 : vector<16x128xi1>, vector<16x128xf32>
    %19 = arith.addf %16, %18 : vector<16x128xf32>
    %c0_7 = arith.constant 0 : index
    %c0_8 = arith.constant 0 : index
    %20 = vector.load %arg4[%c0_7, %c0_8] : memref<16x128xf32, #tpu.memory_space<vmem>>, vector<16x128xf32>
    tpu.vector_store %arg4[%c0_7, %c0_8], %19 {strides = array<i32>} : memref<16x128xf32, #tpu.memory_space<vmem>>, vector<16x128xf32>,
    %c0_i32_9 = arith.constant 0 : i32
    %21 = arith.cmpi eq, %arg1, %c0_i32_9 : i32
    %22 = arith.extui %21 : i1 to i32
    %c0_i32_10 = arith.constant 0 : i32
    %23 = arith.cmpi ne, %22, %c0_i32_10 : i32
    scf.if %23 {
      %c0_11 = arith.constant 0 : index
      %c0_12 = arith.constant 0 : index
      %24 = vector.load %arg4[%c0_11, %c0_12] : memref<16x128xf32, #tpu.memory_space<vmem>>, vector<16x128xf32>
      %25 = vector.shape_cast %24 : vector<16x128xf32> to vector<1x16x128xf32>
      %cst_13 = arith.constant dense<0.000000e+00> : vector<1xf32>
      %26 = vector.multi_reduction <add>, %25, %cst_13 [1, 2] : vector<1x16x128xf32> to vector<1xf32>
      %27 = vector.shape_cast %26 : vector<1xf32> to vector<1x1x1xf32>
      %28 = vector.extract %27[0, 0, 0] : f32 from vector<1x1x1xf32>
      %cst_14 = arith.constant 4.8828125E-4 : f32
      %29 = arith.mulf %28, %cst_14 : f32
      %c0_15 = arith.constant 0 : index
      %c0_16 = arith.constant 0 : index
      %30 = memref.load %arg3[%c0_15, %c0_16] : memref<1x1xf32, #tpu.memory_space<smem>>
      memref.store %29, %arg3[%c0_15, %c0_16] : memref<1x1xf32, #tpu.memory_space<smem>>
    } else {
    }
    return
  }
  func.func @transform_0(%arg0: i32, %arg1: i32) -> (i32, i32) {
    %c1_i32 = arith.constant 1 : i32
    %0 = arith.muli %arg0, %c1_i32 : i32
    %1 = arith.addi %0, %arg1 : i32
    %c0_i32 = arith.constant 0 : i32
    %2 = arith.minsi %1, %c0_i32 : i32
    %c0_i32_0 = arith.constant 0 : i32
    %c0_i32_1 = arith.constant 0 : i32
    return %2, %c0_i32_0 : i32, i32
  }
  func.func @transform_1(%arg0: i32, %arg1: i32) -> (i32, i32) {
    %c0_i32 = arith.constant 0 : i32
    %c0_i32_0 = arith.constant 0 : i32
    return %arg0, %c0_i32 : i32, i32
  }
}

</mosaic_0001>

<llo_original>
// kernel: tpu_custom_call.1
$region0: #{tpu_custom_call.1}
  #allocation0 [shape = 'u32[]', space=smem, size = 0x4, offset = 0x4, fixed_abs, tag = 'smem constant byte address 0x4 - core index']
  #allocation1 [shape = 'u32[144,128]{1,0:T(1,128)}', space=vmem, size = 0x12000, scoped, tag = 'internal scratch']
  #allocation2 [shape = 'f32[16,128]{1,0:T(8,128)}', space=vmem, size = 0x2000, scoped, tag = 'scratch operand']
  %s0 = inlined_call_operand.hbm [shape: f32[16,128], index: 0, kind: input, shape index: {}]
  %s1 = inlined_call_operand.hbm [shape: f32[1,1], index: 1, kind: output, shape index: {}]
  %s2 = sld [smem:[#allocation0]]
  $region26: #{tpu_custom_call.1} parent=0
    _
  %s4 = ssub.s32 1, %s2
  %s5 = scalar_select 0, %s4, %s2
  $region1: #{tpu_custom_call.1} parent=0
    #allocation3 [shape = 'u8[8192]{0}', space=vmem, size = 0x2000, scoped, tag = 'input window, operand 0, single buffered']
    #allocation4 [shape = 's32[1]{0}', space=sflag, size = 0x4, scoped, tag = 'scoped memory for tpu_custom_call.1']
    #allocation5 [shape = 's32[1]{0}', space=sflag, size = 0x4, scoped, tag = 'scoped memory for tpu_custom_call.1']
    #allocation6 [shape = 'u8[512]{0}', space=smem, size = 0x200, scoped, tag = 'output window, operand 0, single buffered']
    %6 = vsyncpa [#allocation4], 0
    %7 = vsyncpa [#allocation5], 0
    // Predicated region
    $region2: #{tpu_custom_call.1} parent=1 // pred_check
      _
    $region3: #{tpu_custom_call.1} parent=1 // pred_check_branch
      %9 = sbr.rel (0) target = $region5
    $region4: #{tpu_custom_call.1} parent=1 // pred_region
      %s10 = sadd.s32 0, 0
      %p11 = scmp.lt.s32.totalorder %s10, 0
      %s12 = scalar_select %p11, %s10, 0
      %s13 = smul.u32 2, %s12
      %s15 = ssub.s32 256, 256
      %16 = vsyncadd [#allocation4], %s15
      %s17 = smul.addr %s13, 128
      %s18 = scalar_lea.hbm %s0, %s17
      %s19 = sshll.u32 [#allocation3], 4
      %s20 = int_to_ptr.vmem [resolvable:$true] %s19
      %25 = dma.hbm_to_vmem [thread:$0]  %s18, 256, %s20, [#allocation4], 128, 128, 8
    $region5: #{tpu_custom_call.1} parent=1 // pred_fallthru
      _
    // Predicated region
    $region6: #{tpu_custom_call.1} parent=1 // pred_check
      _
    $region7: #{tpu_custom_call.1} parent=1 // pred_check_branch
      %27 = sbr.rel (0) target = $region9
    $region8: #{tpu_custom_call.1} parent=1 // pred_region
      %28 = dma.done [#allocation4], 256
    $region9: #{tpu_custom_call.1} parent=1 // pred_fallthru
      _
    %s29 = sadd.s32 0, 0
    %p30 = scmp.lt.s32.totalorder %s29, 0
    %s31 = scalar_select %p30, %s29, 0
    %s32 = smul.u32 2, %s31
    %p33 = scmp.eq.s32.totalorder 0, 0
    // Predicated region
    $region10: #{tpu_custom_call.1} parent=1 // pred_check
      %p34 = pneg %p33
    $region11: #{tpu_custom_call.1} parent=1 // pred_check_branch
      %36 = sbr.rel (%p34) target = $region13
    $region12: #{tpu_custom_call.1} parent=1 // pred_region
      %37 = vst [vmem:[#allocation2] sm:$0xff] 0.0
      %38 = vst [vmem:[#allocation2 + $0x8] sm:$0xff] 0.0
    $region13: #{tpu_custom_call.1} parent=1 // pred_fallthru
      _
    %s39 = sadd.s32 0, 0
    %s40 = smul.u32 %s39, 16
    %v41 = vlaneseq
    %v42 = vshrl.u32 %v41, 7
    %v43 = vadd.s32 %v42, 8
    %v44 = vstv %s40
    %v45 = vadd.s32 %v44, %v42
    %v46 = vadd.s32 %v44, %v43
    %vm47 = vcmp.lt.s32.totalorder %v45, 16
    %vm48 = vcmp.lt.s32.totalorder %v46, 16
    %v49 = vld [vmem:[#allocation3] sm:$0xff]
    %v50 = vld [vmem:[#allocation3 + $0x8] sm:$0xff]
    %v51 = vsub.f32 1.0, %v49
    %v52 = vsub.f32 1.0, %v50
    %v53 = vmax.f32 %v51, 0.0
    %v54 = vmax.f32 %v52, 0.0
    %v55 = vld [vmem:[#allocation2] sm:$0xff]
    %v56 = vld [vmem:[#allocation2 + $0x8] sm:$0xff]
    %v57 = vsel %vm47, %v53, 0.0
    %v58 = vsel %vm48, %v54, 0.0
    %v59 = vadd.f32 %v55, %v57
    %v60 = vadd.f32 %v56, %v58
    %61 = vst [vmem:[#allocation2] sm:$0xff] %v59
    %62 = vst [vmem:[#allocation2 + $0x8] sm:$0xff] %v60
    // Predicated region
    $region14: #{tpu_custom_call.1} parent=1 // pred_check
      %p63 = pneg %p33
    $region15: #{tpu_custom_call.1} parent=1 // pred_check_branch
      %65 = sbr.rel (%p63) target = $region17
    $region16: #{tpu_custom_call.1} parent=1 // pred_region
      %v66 = vld [vmem:[#allocation2] sm:$0xff]
      %v67 = vld [vmem:[#allocation2 + $0x8] sm:$0xff]
      %v68 = vadd.f32 %v66, %v67
      %69 = vadd.xlane.f32.xlu0 %v68
      %v70 = vpop.xlane.xlu0 %69
      %v71 = vrot.slane %v70, 4
      %v72 = vadd.f32 %v70, %v71
      %v73 = vrot.slane %v72, 2
      %v74 = vadd.f32 %v72, %v73
      %v75 = vrot.slane %v74, 1
      %v76 = vadd.f32 %v74, %v75
      %s77 = vtos %v76
      %s78 = smul.f32 %s77, 0.00048828125
      %s79 = scalar_lea.smem [#allocation6], 0
      %80 = sst [smem:[%s79]] %s78
    $region17: #{tpu_custom_call.1} parent=1 // pred_fallthru
      _
    // Predicated region
    $region18: #{tpu_custom_call.1} parent=1 // pred_check
      _
    $region19: #{tpu_custom_call.1} parent=1 // pred_check_branch
      %82 = sbr.rel (0) target = $region21
    $region20: #{tpu_custom_call.1} parent=1 // pred_region
      %s84 = ssub.s32 16, 16
      %85 = vsyncadd [#allocation5], %s84
      %88 = dma.smem_to_hbm [#allocation6], 16, %s1, [#allocation5]
    $region21: #{tpu_custom_call.1} parent=1 // pred_fallthru
      _
    // Predicated region
    $region22: #{tpu_custom_call.1} parent=1 // pred_check
      _
    $region23: #{tpu_custom_call.1} parent=1 // pred_check_branch
      %90 = sbr.rel (0) target = $region25
    $region24: #{tpu_custom_call.1} parent=1 // pred_region
      %91 = dma.done [#allocation5], 16
    $region25: #{tpu_custom_call.1} parent=1 // pred_fallthru
      _
    %92 = sfence
    %93 = vsyncpa [#allocation4], 1
    %94 = vsyncpa [#allocation5], 1

</llo_original>
